<compile_context>
chip_gen: v7x
topology: tpu7x:2x2x1
jax: 0.10.0
libtpu: 0.0.40
codegen_flags: <defaults>
</compile_context>

<pallas_src>
import functools

import jax
import jax.numpy as jnp
from jax.experimental import pallas as pl
from jax.experimental.pallas import tpu as pltpu

BN_EPS = 1e-5


def fusion_kernel(bot_ref, w2t_ref, g1_ref, b1_ref, w1a_ref, w1b_ref,
                  g_ref, b_ref, mid_ref, out_ref,
                  yT_ref, ycol_ref, sum_ref, ssq_ref, scale_ref, shift_ref, z_ref,
                  *, n_total, tiles_per_batch, p_valid, tile_p,
                  resident_z, needs_mask):
    p = pl.program_id(0)   # 0 = stats pass, 1 = normalize / write pass
    b = pl.program_id(1)   # batch index
    t = pl.program_id(2)   # spatial tile index within the batch

    # ---- one-time bottom path (tiny): conv_2 (1x1) -> ReLU -> BN1 (batch
    #      stats, fused scale/shift) -> fold through the bottom half of `conv`'s
    #      weight.  Result yT[c_out, b] is spatially constant per batch.
    @pl.when(jnp.logical_and(p == 0, jnp.logical_and(b == 0, t == 0)))
    def _():
        bot = bot_ref[...]                                                   # (B, K)
        y = jnp.dot(bot, w2t_ref[...], preferred_element_type=jnp.float32)   # (B, C)
        y = jnp.maximum(y, 0.0)
        inv_b = 1.0 / bot_ref.shape[0]
        mu1 = jnp.sum(y, axis=0, keepdims=True) * inv_b                      # (1, C)
        var1 = jnp.maximum(
            jnp.sum(y * y, axis=0, keepdims=True) * inv_b - mu1 * mu1, 0.0)
        scale1 = g1_ref[...] * jax.lax.rsqrt(var1 + BN_EPS)
        shift1 = b1_ref[...] - mu1 * scale1
        y = y * scale1 + shift1                                              # (B, C)
        # yT[o, b] = sum_c w1b[o, c] * y[b, c]   (no explicit transpose op)
        yT_ref[...] = jnp.einsum('oc,bc->ob', w1b_ref[...], y,
                                 preferred_element_type=jnp.float32)         # (C, B)
        sum_ref[...] = jnp.zeros_like(sum_ref)
        ssq_ref[...] = jnp.zeros_like(ssq_ref)

    # ---- per-batch bottom-branch column, hoisted out of the tile loop
    @pl.when(t == 0)
    def _():
        lane = jax.lax.broadcasted_iota(jnp.int32, yT_ref.shape, 1)
        ycol_ref[...] = jnp.sum(jnp.where(lane == b, yT_ref[...], 0.0),
                                axis=-1, keepdims=True)                      # (C, 1)

    def compute_z():
        z = jnp.dot(w1a_ref[...], mid_ref[...],
                    preferred_element_type=jnp.float32)                      # (C, tile)
        return jnp.maximum(z + ycol_ref[...], 0.0)

    @pl.when(p == 0)
    def _():
        z = compute_z()
        if needs_mask:
            lane = jax.lax.broadcasted_iota(jnp.int32, z.shape, 1)
            zs = jnp.where(t * tile_p + lane < p_valid, z, 0.0)
        else:
            zs = z
        # single reduce per tile over the lane axis for the BN statistics
        sum_ref[...] += jnp.sum(zs, axis=-1, keepdims=True)
        ssq_ref[...] += jnp.sum(zs * zs, axis=-1, keepdims=True)
        if resident_z:
            z_ref[b * tiles_per_batch + t] = z   # keep tile resident for pass 1

    # ---- fold BN stats + affine into a single per-channel scale/shift (once)
    @pl.when(jnp.logical_and(p == 1, jnp.logical_and(b == 0, t == 0)))
    def _():
        inv_n = 1.0 / n_total
        mu = sum_ref[...] * inv_n                                            # (C, 1)
        var = jnp.maximum(ssq_ref[...] * inv_n - mu * mu, 0.0)
        sc = g_ref[...] * jax.lax.rsqrt(var + BN_EPS)
        scale_ref[...] = sc
        shift_ref[...] = b_ref[...] - mu * sc

    @pl.when(p == 1)
    def _():
        if resident_z:
            z = z_ref[b * tiles_per_batch + t]
        else:
            z = compute_z()
        out_ref[...] = (z * scale_ref[...] + shift_ref[...]).astype(out_ref.dtype)


def _round_up(x, m):
    return ((x + m - 1) // m) * m


def _pick_tile(ppad, c_sub, budget_bytes=8 << 20):
    # largest lane-dense tile dividing the padded per-batch spatial extent whose
    # double-buffered mid + out tiles stay within `budget_bytes`.
    for t in (8192, 4096, 2048, 1024, 512, 256, 128):
        if ppad % t == 0 and 4 * c_sub * t * 4 <= budget_bytes:
            return t
    return 128


def fusion_forward(mid_nchw, bottom_nchw, w_conv, w_conv2, gamma1, beta1, gamma, beta):
    """mid_nchw: (B, C, H, W); bottom_nchw: (B, K, 1, 1);
    w_conv: (C, 2C, 1, 1); w_conv2: (C, K, 1, 1)."""
    B, C, H, W = mid_nchw.shape
    P = H * W
    K = w_conv2.shape[1]
    assert w_conv.shape[0] == C and w_conv.shape[1] == 2 * C

    # lane-dense padding of the per-batch spatial axis; padded columns are
    # excluded from the BN statistics in-kernel and sliced off below.
    Ppad = _round_up(P, 128)
    needs_mask = Ppad != P

    mid3 = mid_nchw.reshape(B, C, P)            # free reshape, no transpose
    if needs_mask:
        mid3 = jnp.pad(mid3, ((0, 0), (0, 0), (0, Ppad - P)))

    c_sub = max(_round_up(C, 8), 8)
    tile_p = _pick_tile(Ppad, c_sub)
    T = Ppad // tile_p

    # single-compute fast path: keep all z tiles resident in VMEM so pass 1
    # neither re-reads mid nor recomputes the conv (budget sized for v7x VMEM).
    z_bytes = B * T * c_sub * tile_p * 4
    resident_z = z_bytes <= (20 << 20)

    bot = bottom_nchw.reshape(B, K)
    w1 = w_conv.reshape(C, 2 * C)
    w1a = w1[:, :C]                     # acts on mid channels
    w1b = w1[:, C:]                     # acts on (expanded) bottom channels
    w2t = w_conv2.reshape(C, K).T       # pre-transposed for bot @ w2t

    def full(shape):
        return pl.BlockSpec(shape, lambda p, b, t: (0,) * len(shape))

    if resident_z:
        # pin the mid block during pass 1 (stays on the last pass-0 block ->
        # zero extra DMA); z is read back from the resident scratch instead.
        mid_index = lambda p, b, t: (b * (1 - p) + (B - 1) * p, 0,
                                     t * (1 - p) + (T - 1) * p)
    else:
        mid_index = lambda p, b, t: (b, 0, t)
    # output block pinned (never written) during pass 0 -> single writeback/block
    out_index = lambda p, b, t: (b * p, 0, t * p)

    tile_bytes = c_sub * tile_p * 4
    est = 4 * tile_bytes + (z_bytes if resident_z else 0) + (4 << 20)
    vmem_limit = int(min(64 << 20, max(32 << 20, est + (8 << 20))))

    kernel = functools.partial(
        fusion_kernel, n_total=float(B * P), tiles_per_batch=T,
        p_valid=P, tile_p=tile_p, resident_z=resident_z, needs_mask=needs_mask)

    out3 = pl.pallas_call(
        kernel,
        out_shape=jax.ShapeDtypeStruct((B, C, Ppad), jnp.float32),
        grid_spec=pltpu.PrefetchScalarGridSpec(
            num_scalar_prefetch=0,
            grid=(2, B, T),
            in_specs=[
                full((B, K)),                                         # bottom features
                full((K, C)),                                         # conv_2 weight^T
                full((1, C)),                                         # bn1 gamma
                full((1, C)),                                         # bn1 beta
                full((C, C)),                                         # conv weight (mid half)
                full((C, C)),                                         # conv weight (bottom half)
                full((C, 1)),                                         # bn gamma
                full((C, 1)),                                         # bn beta
                pl.BlockSpec((pl.Squeezed(), C, tile_p), mid_index),  # mid tile (lane-dense)
            ],
            out_specs=pl.BlockSpec((pl.Squeezed(), C, tile_p), out_index),
            scratch_shapes=[
                pltpu.VMEM((C, B), jnp.float32),   # yT: bottom-branch columns
                pltpu.VMEM((C, 1), jnp.float32),   # current batch's bottom column
                pltpu.VMEM((C, 1), jnp.float32),   # per-channel sum
                pltpu.VMEM((C, 1), jnp.float32),   # per-channel sum of squares
                pltpu.VMEM((C, 1), jnp.float32),   # fused BN scale
                pltpu.VMEM((C, 1), jnp.float32),   # fused BN shift
                pltpu.VMEM((B * T, C, tile_p) if resident_z else (1, 1, 1),
                           jnp.float32),           # resident z tiles (fast path)
            ],
        ),
        compiler_params=pltpu.CompilerParams(
            dimension_semantics=("arbitrary", "arbitrary", "arbitrary"),
            vmem_limit_bytes=vmem_limit),
    )(bot, w2t, gamma1.reshape(1, C), beta1.reshape(1, C),
      w1a, w1b, gamma.reshape(C, 1), beta.reshape(C, 1), mid3)

    out3 = out3[:, :, :P] if needs_mask else out3
    return out3.reshape(B, C, H, W)


def fusion_reference(mid, bottom, w_conv, w_conv2, gamma1, beta1, gamma, beta):
    """Pure-JAX mirror of the PyTorch forward (training-mode BatchNorm)."""
    y = jnp.einsum('ok,bkhw->bohw', w_conv2[:, :, 0, 0], bottom)
    y = jnp.maximum(y, 0.0)
    mu1 = jnp.mean(y, axis=(0, 2, 3), keepdims=True)
    var1 = jnp.mean((y - mu1) ** 2, axis=(0, 2, 3), keepdims=True)
    y = gamma1[None, :, None, None] * (y - mu1) / jnp.sqrt(var1 + BN_EPS) \
        + beta1[None, :, None, None]
    B, C, H, W = mid.shape
    y = jnp.broadcast_to(y, (B, C, H, W))
    cat = jnp.concatenate([mid, y], axis=1)
    out = jnp.einsum('oc,bchw->bohw', w_conv[:, :, 0, 0], cat)
    out = jnp.maximum(out, 0.0)
    mu = jnp.mean(out, axis=(0, 2, 3), keepdims=True)
    var = jnp.mean((out - mu) ** 2, axis=(0, 2, 3), keepdims=True)
    return gamma[None, :, None, None] * (out - mu) / jnp.sqrt(var + BN_EPS) \
        + beta[None, :, None, None]


if __name__ == "__main__":
    # Small shapes consistent with the module: in_ch=4, bottom=32.
    B, C, H, W, K = 2, 4, 16, 16, 32

    key = jax.random.PRNGKey(0)
    k_mid, k_bot, k_w1, k_w2, k_g1, k_b1, k_g, k_b = jax.random.split(key, 8)
    mid = jax.random.normal(k_mid, (B, C, H, W), dtype=jnp.float32)
    bottom = jax.random.normal(k_bot, (B, K, 1, 1), dtype=jnp.float32)

    w_conv = jax.random.normal(k_w1, (C, 2 * C, 1, 1), dtype=jnp.float32) * 0.1
    w_conv2 = jax.random.normal(k_w2, (C, K, 1, 1), dtype=jnp.float32) * 0.1
    # non-trivial BN affine parameters to exercise the fused scale/shift path
    gamma1 = 1.0 + 0.1 * jax.random.normal(k_g1, (C,), dtype=jnp.float32)
    beta1 = 0.1 * jax.random.normal(k_b1, (C,), dtype=jnp.float32)
    gamma = 1.0 + 0.1 * jax.random.normal(k_g, (C,), dtype=jnp.float32)
    beta = 0.1 * jax.random.normal(k_b, (C,), dtype=jnp.float32)

    out = fusion_forward(mid, bottom, w_conv, w_conv2, gamma1, beta1, gamma, beta)
    out = jax.block_until_ready(out)

    ref = fusion_reference(mid, bottom, w_conv, w_conv2, gamma1, beta1, gamma, beta)
    assert out.shape == (B, C, H, W)
    assert jnp.allclose(out, ref, atol=1e-4, rtol=1e-4), "mismatch vs JAX reference"
    print("KERNEL_OK")
</pallas_src>

<mosaic_0001>
module attributes {stable_mosaic.version = 11 : i64} {
  func.func @fusion_kernel(%arg0: i32, %arg1: i32, %arg2: i32, %arg3: memref<2x32xf32, #tpu.memory_space<vmem>>, %arg4: memref<32x4xf32, #tpu.memory_space<vmem>>, %arg5: memref<1x4xf32, #tpu.memory_space<vmem>>, %arg6: memref<1x4xf32, #tpu.memory_space<vmem>>, %arg7: memref<4x4xf32, #tpu.memory_space<vmem>>, %arg8: memref<4x4xf32, #tpu.memory_space<vmem>>, %arg9: memref<4x1xf32, #tpu.memory_space<vmem>>, %arg10: memref<4x1xf32, #tpu.memory_space<vmem>>, %arg11: memref<1x4x256xf32, #tpu.memory_space<vmem>>, %arg12: memref<1x4x256xf32, #tpu.memory_space<vmem>>, %arg13: memref<4x2xf32, #tpu.memory_space<vmem>>, %arg14: memref<4x1xf32, #tpu.memory_space<vmem>>, %arg15: memref<4x1xf32, #tpu.memory_space<vmem>>, %arg16: memref<4x1xf32, #tpu.memory_space<vmem>>, %arg17: memref<4x1xf32, #tpu.memory_space<vmem>>, %arg18: memref<4x1xf32, #tpu.memory_space<vmem>>, %arg19: memref<2x4x256xf32, #tpu.memory_space<vmem>>) attributes {dimension_semantics = [#tpu.dimension_semantics<arbitrary>, #tpu.dimension_semantics<arbitrary>, #tpu.dimension_semantics<arbitrary>], iteration_bounds = array<i64: 2, 2, 1>, scalar_prefetch = 0 : i64, scratch_operands = 7 : i64, tpu.core_type = #tpu.core_type<tc>, window_params = [{pipeline_mode = #tpu.pipeline_mode<synchronous>, transform_indices = @transform_0, window_bounds = array<i64: 2, 32>}, {pipeline_mode = #tpu.pipeline_mode<synchronous>, transform_indices = @transform_1, window_bounds = array<i64: 32, 4>}, {pipeline_mode = #tpu.pipeline_mode<synchronous>, transform_indices = @transform_2, window_bounds = array<i64: 1, 4>}, {pipeline_mode = #tpu.pipeline_mode<synchronous>, transform_indices = @transform_3, window_bounds = array<i64: 1, 4>}, {pipeline_mode = #tpu.pipeline_mode<synchronous>, transform_indices = @transform_4, window_bounds = array<i64: 4, 4>}, {pipeline_mode = #tpu.pipeline_mode<synchronous>, transform_indices = @transform_5, window_bounds = array<i64: 4, 4>}, {pipeline_mode = #tpu.pipeline_mode<synchronous>, transform_indices = @transform_6, window_bounds = array<i64: 4, 1>}, {pipeline_mode = #tpu.pipeline_mode<synchronous>, transform_indices = @transform_7, window_bounds = array<i64: 4, 1>}, {transform_indices = @transform_8, window_bounds = array<i64: 1, 4, 256>}, {transform_indices = @transform_9, window_bounds = array<i64: 1, 4, 256>}]} {
    %c0_i32 = arith.constant 0 : i32
    %0 = arith.cmpi eq, %arg0, %c0_i32 : i32
    %c0_i32_0 = arith.constant 0 : i32
    %1 = arith.cmpi eq, %arg1, %c0_i32_0 : i32
    %c0_i32_1 = arith.constant 0 : i32
    %2 = arith.cmpi eq, %arg2, %c0_i32_1 : i32
    %3 = arith.andi %1, %2 : i1
    %4 = arith.andi %0, %3 : i1
    %5 = arith.extui %4 : i1 to i32
    %c0_i32_2 = arith.constant 0 : i32
    %6 = arith.cmpi ne, %5, %c0_i32_2 : i32
    scf.if %6 {
      %c0 = arith.constant 0 : index
      %c0_12 = arith.constant 0 : index
      %23 = vector.load %arg3[%c0, %c0_12] : memref<2x32xf32, #tpu.memory_space<vmem>>, vector<2x32xf32>
      %c0_13 = arith.constant 0 : index
      %c0_14 = arith.constant 0 : index
      %24 = vector.load %arg4[%c0_13, %c0_14] : memref<32x4xf32, #tpu.memory_space<vmem>>, vector<32x4xf32>
      %cst = arith.constant dense<0.000000e+00> : vector<2x4xf32>
      %25 = tpu.matmul %23, %24, %cst {dimension_numbers = #tpu.dot_dimension_numbers<[1], [0], [0], [1], [0, 0, 1, 1], [], []>} : vector<2x32xf32>, vector<32x4xf32>, vector<2x4xf32> -> vector<2x4xf32>
      %cst_15 = arith.constant 0.000000e+00 : f32
      %26 = vector.broadcast %cst_15 : f32 to vector<2x4xf32>
      %27 = arith.maximumf %25, %26 : vector<2x4xf32>
      %cst_16 = arith.constant dense<0.000000e+00> : vector<4xf32>
      %28 = vector.multi_reduction <add>, %27, %cst_16 [0] : vector<2x4xf32> to vector<4xf32>
      %29 = vector.shape_cast %28 : vector<4xf32> to vector<1x4xf32>
      %cst_17 = arith.constant 5.000000e-01 : f32
      %30 = vector.broadcast %cst_17 : f32 to vector<1x4xf32>
      %31 = arith.mulf %29, %30 : vector<1x4xf32>
      %32 = arith.mulf %27, %27 : vector<2x4xf32>
      %cst_18 = arith.constant dense<0.000000e+00> : vector<4xf32>
      %33 = vector.multi_reduction <add>, %32, %cst_18 [0] : vector<2x4xf32> to vector<4xf32>
      %34 = vector.shape_cast %33 : vector<4xf32> to vector<1x4xf32>
      %cst_19 = arith.constant 5.000000e-01 : f32
      %35 = vector.broadcast %cst_19 : f32 to vector<1x4xf32>
      %36 = arith.mulf %34, %35 : vector<1x4xf32>
      %37 = arith.mulf %31, %31 : vector<1x4xf32>
      %38 = arith.subf %36, %37 : vector<1x4xf32>
      %cst_20 = arith.constant 0.000000e+00 : f32
      %39 = vector.broadcast %cst_20 : f32 to vector<1x4xf32>
      %40 = arith.maximumf %38, %39 : vector<1x4xf32>
      %c0_21 = arith.constant 0 : index
      %c0_22 = arith.constant 0 : index
      %41 = vector.load %arg5[%c0_21, %c0_22] : memref<1x4xf32, #tpu.memory_space<vmem>>, vector<1x4xf32>
      %cst_23 = arith.constant 9.99999974E-6 : f32
      %42 = vector.broadcast %cst_23 : f32 to vector<1x4xf32>
      %43 = arith.addf %40, %42 : vector<1x4xf32>
      %44 = math.rsqrt %43 : vector<1x4xf32>
      %45 = arith.mulf %41, %44 : vector<1x4xf32>
      %c0_24 = arith.constant 0 : index
      %c0_25 = arith.constant 0 : index
      %46 = vector.load %arg6[%c0_24, %c0_25] : memref<1x4xf32, #tpu.memory_space<vmem>>, vector<1x4xf32>
      %47 = arith.mulf %31, %45 : vector<1x4xf32>
      %48 = arith.subf %46, %47 : vector<1x4xf32>
      %49 = vector.broadcast %45 : vector<1x4xf32> to vector<2x4xf32>
      %50 = arith.mulf %27, %49 : vector<2x4xf32>
      %51 = vector.broadcast %48 : vector<1x4xf32> to vector<2x4xf32>
      %52 = arith.addf %50, %51 : vector<2x4xf32>
      %c0_26 = arith.constant 0 : index
      %c0_27 = arith.constant 0 : index
      %53 = vector.load %arg8[%c0_26, %c0_27] : memref<4x4xf32, #tpu.memory_space<vmem>>, vector<4x4xf32>
      "tpu.trace_start"() <{level = 10 : i32, message = "oc,bc->ob"}> : () -> ()
      %cst_28 = arith.constant dense<0.000000e+00> : vector<4x2xf32>
      %54 = tpu.matmul %53, %52, %cst_28 {dimension_numbers = #tpu.dot_dimension_numbers<[1], [1], [0], [0], [0, 0, 1, 0], [], []>} : vector<4x4xf32>, vector<2x4xf32>, vector<4x2xf32> -> vector<4x2xf32>
      "tpu.trace_stop"() : () -> ()
      %c0_29 = arith.constant 0 : index
      %c0_30 = arith.constant 0 : index
      %55 = vector.load %arg13[%c0_29, %c0_30] : memref<4x2xf32, #tpu.memory_space<vmem>>, vector<4x2xf32>
      tpu.vector_store %arg13[%c0_29, %c0_30], %54 {strides = array<i32>} : memref<4x2xf32, #tpu.memory_space<vmem>>, vector<4x2xf32>,
      %cst_31 = arith.constant 0.000000e+00 : f32
      %56 = vector.broadcast %cst_31 : f32 to vector<4x1xf32>
      %c0_32 = arith.constant 0 : index
      %c0_33 = arith.constant 0 : index
      %57 = vector.load %arg15[%c0_32, %c0_33] : memref<4x1xf32, #tpu.memory_space<vmem>>, vector<4x1xf32>
      tpu.vector_store %arg15[%c0_32, %c0_33], %56 {strides = array<i32>} : memref<4x1xf32, #tpu.memory_space<vmem>>, vector<4x1xf32>,
      %cst_34 = arith.constant 0.000000e+00 : f32
      %58 = vector.broadcast %cst_34 : f32 to vector<4x1xf32>
      %c0_35 = arith.constant 0 : index
      %c0_36 = arith.constant 0 : index
      %59 = vector.load %arg16[%c0_35, %c0_36] : memref<4x1xf32, #tpu.memory_space<vmem>>, vector<4x1xf32>
      tpu.vector_store %arg16[%c0_35, %c0_36], %58 {strides = array<i32>} : memref<4x1xf32, #tpu.memory_space<vmem>>, vector<4x1xf32>,
    } else {
    }
    %c0_i32_3 = arith.constant 0 : i32
    %7 = arith.cmpi eq, %arg2, %c0_i32_3 : i32
    %8 = arith.extui %7 : i1 to i32
    %c0_i32_4 = arith.constant 0 : i32
    %9 = arith.cmpi ne, %8, %c0_i32_4 : i32
    scf.if %9 {
      %23 = tpu.iota {dimensions = array<i32: 1>} : vector<4x2xi32>
      %24 = vector.broadcast %arg1 : i32 to vector<4x2xi32>
      %25 = arith.cmpi eq, %23, %24 : vector<4x2xi32>
      %c0 = arith.constant 0 : index
      %c0_12 = arith.constant 0 : index
      %26 = vector.load %arg13[%c0, %c0_12] : memref<4x2xf32, #tpu.memory_space<vmem>>, vector<4x2xf32>
      %cst = arith.constant 0.000000e+00 : f32
      %27 = vector.broadcast %cst : f32 to vector<4x2xf32>
      %28 = arith.select %25, %26, %27 : vector<4x2xi1>, vector<4x2xf32>
      %cst_13 = arith.constant dense<0.000000e+00> : vector<4xf32>
      %29 = vector.multi_reduction <add>, %28, %cst_13 [1] : vector<4x2xf32> to vector<4xf32>
      %30 = vector.shape_cast %29 : vector<4xf32> to vector<4x1xf32>
      %c0_14 = arith.constant 0 : index
      %c0_15 = arith.constant 0 : index
      %31 = vector.load %arg14[%c0_14, %c0_15] : memref<4x1xf32, #tpu.memory_space<vmem>>, vector<4x1xf32>
      tpu.vector_store %arg14[%c0_14, %c0_15], %30 {strides = array<i32>} : memref<4x1xf32, #tpu.memory_space<vmem>>, vector<4x1xf32>,
    } else {
    }
    %c0_i32_5 = arith.constant 0 : i32
    %10 = arith.cmpi eq, %arg0, %c0_i32_5 : i32
    %11 = arith.extui %10 : i1 to i32
    %c0_i32_6 = arith.constant 0 : i32
    %12 = arith.cmpi ne, %11, %c0_i32_6 : i32
    scf.if %12 {
      %c0 = arith.constant 0 : index
      %c0_12 = arith.constant 0 : index
      %23 = vector.load %arg7[%c0, %c0_12] : memref<4x4xf32, #tpu.memory_space<vmem>>, vector<4x4xf32>
      %c0_13 = arith.constant 0 : index
      %c0_14 = arith.constant 0 : index
      %c0_15 = arith.constant 0 : index
      %24 = vector.load %arg11[%c0_13, %c0_14, %c0_15] : memref<1x4x256xf32, #tpu.memory_space<vmem>>, vector<1x4x256xf32>
      %25 = vector.shape_cast %24 : vector<1x4x256xf32> to vector<4x256xf32>
      %cst = arith.constant dense<0.000000e+00> : vector<4x256xf32>
      %26 = tpu.matmul %23, %25, %cst {dimension_numbers = #tpu.dot_dimension_numbers<[1], [0], [0], [1], [0, 0, 1, 1], [], []>} : vector<4x4xf32>, vector<4x256xf32>, vector<4x256xf32> -> vector<4x256xf32>
      %c0_16 = arith.constant 0 : index
      %c0_17 = arith.constant 0 : index
      %27 = vector.load %arg14[%c0_16, %c0_17] : memref<4x1xf32, #tpu.memory_space<vmem>>, vector<4x1xf32>
      %28 = vector.broadcast %27 : vector<4x1xf32> to vector<4x256xf32>
      %29 = arith.addf %26, %28 : vector<4x256xf32>
      %cst_18 = arith.constant 0.000000e+00 : f32
      %30 = vector.broadcast %cst_18 : f32 to vector<4x256xf32>
      %31 = arith.maximumf %29, %30 : vector<4x256xf32>
      %c0_19 = arith.constant 0 : index
      %c0_20 = arith.constant 0 : index
      %32 = vector.load %arg15[%c0_19, %c0_20] : memref<4x1xf32, #tpu.memory_space<vmem>>, vector<4x1xf32>
      %cst_21 = arith.constant dense<0.000000e+00> : vector<4xf32>
      %33 = vector.multi_reduction <add>, %31, %cst_21 [1] : vector<4x256xf32> to vector<4xf32>
      %34 = vector.shape_cast %33 : vector<4xf32> to vector<4x1xf32>
      %35 = arith.addf %32, %34 : vector<4x1xf32>
      %c0_22 = arith.constant 0 : index
      %c0_23 = arith.constant 0 : index
      %36 = vector.load %arg15[%c0_22, %c0_23] : memref<4x1xf32, #tpu.memory_space<vmem>>, vector<4x1xf32>
      tpu.vector_store %arg15[%c0_22, %c0_23], %35 {strides = array<i32>} : memref<4x1xf32, #tpu.memory_space<vmem>>, vector<4x1xf32>,
      %c0_24 = arith.constant 0 : index
      %c0_25 = arith.constant 0 : index
      %37 = vector.load %arg16[%c0_24, %c0_25] : memref<4x1xf32, #tpu.memory_space<vmem>>, vector<4x1xf32>
      %38 = arith.mulf %31, %31 : vector<4x256xf32>
      %cst_26 = arith.constant dense<0.000000e+00> : vector<4xf32>
      %39 = vector.multi_reduction <add>, %38, %cst_26 [1] : vector<4x256xf32> to vector<4xf32>
      %40 = vector.shape_cast %39 : vector<4xf32> to vector<4x1xf32>
      %41 = arith.addf %37, %40 : vector<4x1xf32>
      %c0_27 = arith.constant 0 : index
      %c0_28 = arith.constant 0 : index
      %42 = vector.load %arg16[%c0_27, %c0_28] : memref<4x1xf32, #tpu.memory_space<vmem>>, vector<4x1xf32>
      tpu.vector_store %arg16[%c0_27, %c0_28], %41 {strides = array<i32>} : memref<4x1xf32, #tpu.memory_space<vmem>>, vector<4x1xf32>,
      %c1_i32_29 = arith.constant 1 : i32
      %43 = arith.muli %arg1, %c1_i32_29 : i32
      %44 = arith.addi %43, %arg2 : i32
      %45 = arith.index_cast %44 : i32 to index
      %c0_30 = arith.constant 0 : index
      %c0_31 = arith.constant 0 : index
      %46 = vector.load %arg19[%45, %c0_30, %c0_31] : memref<2x4x256xf32, #tpu.memory_space<vmem>>, vector<1x4x256xf32>
      %47 = vector.shape_cast %46 : vector<1x4x256xf32> to vector<4x256xf32>
      %48 = vector.shape_cast %31 : vector<4x256xf32> to vector<1x4x256xf32>
      tpu.vector_store %arg19[%45, %c0_30, %c0_31], %48 {strides = array<i32>} : memref<2x4x256xf32, #tpu.memory_space<vmem>>, vector<1x4x256xf32>,
    } else {
    }
    %c1_i32 = arith.constant 1 : i32
    %13 = arith.cmpi eq, %arg0, %c1_i32 : i32
    %c0_i32_7 = arith.constant 0 : i32
    %14 = arith.cmpi eq, %arg1, %c0_i32_7 : i32
    %c0_i32_8 = arith.constant 0 : i32
    %15 = arith.cmpi eq, %arg2, %c0_i32_8 : i32
    %16 = arith.andi %14, %15 : i1
    %17 = arith.andi %13, %16 : i1
    %18 = arith.extui %17 : i1 to i32
    %c0_i32_9 = arith.constant 0 : i32
    %19 = arith.cmpi ne, %18, %c0_i32_9 : i32
    scf.if %19 {
      %c0 = arith.constant 0 : index
      %c0_12 = arith.constant 0 : index
      %23 = vector.load %arg15[%c0, %c0_12] : memref<4x1xf32, #tpu.memory_space<vmem>>, vector<4x1xf32>
      %cst = arith.constant 0.001953125 : f32
      %24 = vector.broadcast %cst : f32 to vector<4x1xf32>
      %25 = arith.mulf %23, %24 : vector<4x1xf32>
      %c0_13 = arith.constant 0 : index
      %c0_14 = arith.constant 0 : index
      %26 = vector.load %arg16[%c0_13, %c0_14] : memref<4x1xf32, #tpu.memory_space<vmem>>, vector<4x1xf32>
      %cst_15 = arith.constant 0.001953125 : f32
      %27 = vector.broadcast %cst_15 : f32 to vector<4x1xf32>
      %28 = arith.mulf %26, %27 : vector<4x1xf32>
      %29 = arith.mulf %25, %25 : vector<4x1xf32>
      %30 = arith.subf %28, %29 : vector<4x1xf32>
      %cst_16 = arith.constant 0.000000e+00 : f32
      %31 = vector.broadcast %cst_16 : f32 to vector<4x1xf32>
      %32 = arith.maximumf %30, %31 : vector<4x1xf32>
      %c0_17 = arith.constant 0 : index
      %c0_18 = arith.constant 0 : index
      %33 = vector.load %arg9[%c0_17, %c0_18] : memref<4x1xf32, #tpu.memory_space<vmem>>, vector<4x1xf32>
      %cst_19 = arith.constant 9.99999974E-6 : f32
      %34 = vector.broadcast %cst_19 : f32 to vector<4x1xf32>
      %35 = arith.addf %32, %34 : vector<4x1xf32>
      %36 = math.rsqrt %35 : vector<4x1xf32>
      %37 = arith.mulf %33, %36 : vector<4x1xf32>
      %c0_20 = arith.constant 0 : index
      %c0_21 = arith.constant 0 : index
      %38 = vector.load %arg17[%c0_20, %c0_21] : memref<4x1xf32, #tpu.memory_space<vmem>>, vector<4x1xf32>
      tpu.vector_store %arg17[%c0_20, %c0_21], %37 {strides = array<i32>} : memref<4x1xf32, #tpu.memory_space<vmem>>, vector<4x1xf32>,
      %c0_22 = arith.constant 0 : index
      %c0_23 = arith.constant 0 : index
      %39 = vector.load %arg10[%c0_22, %c0_23] : memref<4x1xf32, #tpu.memory_space<vmem>>, vector<4x1xf32>
      %40 = arith.mulf %25, %37 : vector<4x1xf32>
      %41 = arith.subf %39, %40 : vector<4x1xf32>
      %c0_24 = arith.constant 0 : index
      %c0_25 = arith.constant 0 : index
      %42 = vector.load %arg18[%c0_24, %c0_25] : memref<4x1xf32, #tpu.memory_space<vmem>>, vector<4x1xf32>
      tpu.vector_store %arg18[%c0_24, %c0_25], %41 {strides = array<i32>} : memref<4x1xf32, #tpu.memory_space<vmem>>, vector<4x1xf32>,
    } else {
    }
    %c1_i32_10 = arith.constant 1 : i32
    %20 = arith.cmpi eq, %arg0, %c1_i32_10 : i32
    %21 = arith.extui %20 : i1 to i32
    %c0_i32_11 = arith.constant 0 : i32
    %22 = arith.cmpi ne, %21, %c0_i32_11 : i32
    scf.if %22 {
      %c1_i32_12 = arith.constant 1 : i32
      %23 = arith.muli %arg1, %c1_i32_12 : i32
      %24 = arith.addi %23, %arg2 : i32
      %25 = arith.index_cast %24 : i32 to index
      %c0 = arith.constant 0 : index
      %c0_13 = arith.constant 0 : index
      %26 = vector.load %arg19[%25, %c0, %c0_13] : memref<2x4x256xf32, #tpu.memory_space<vmem>>, vector<1x4x256xf32>
      %27 = vector.shape_cast %26 : vector<1x4x256xf32> to vector<4x256xf32>
      %c0_14 = arith.constant 0 : index
      %c0_15 = arith.constant 0 : index
      %28 = vector.load %arg17[%c0_14, %c0_15] : memref<4x1xf32, #tpu.memory_space<vmem>>, vector<4x1xf32>
      %29 = vector.broadcast %28 : vector<4x1xf32> to vector<4x256xf32>
      %30 = arith.mulf %27, %29 : vector<4x256xf32>
      %c0_16 = arith.constant 0 : index
      %c0_17 = arith.constant 0 : index
      %31 = vector.load %arg18[%c0_16, %c0_17] : memref<4x1xf32, #tpu.memory_space<vmem>>, vector<4x1xf32>
      %32 = vector.broadcast %31 : vector<4x1xf32> to vector<4x256xf32>
      %33 = arith.addf %30, %32 : vector<4x256xf32>
      %c0_18 = arith.constant 0 : index
      %c0_19 = arith.constant 0 : index
      %c0_20 = arith.constant 0 : index
      %34 = vector.load %arg12[%c0_18, %c0_19, %c0_20] : memref<1x4x256xf32, #tpu.memory_space<vmem>>, vector<1x4x256xf32>
      %35 = vector.shape_cast %34 : vector<1x4x256xf32> to vector<4x256xf32>
      %36 = vector.shape_cast %33 : vector<4x256xf32> to vector<1x4x256xf32>
      tpu.vector_store %arg12[%c0_18, %c0_19, %c0_20], %36 {strides = array<i32>} : memref<1x4x256xf32, #tpu.memory_space<vmem>>, vector<1x4x256xf32>,
    } else {
    }
    return
  }
  func.func @transform_0(%arg0: i32, %arg1: i32, %arg2: i32) -> (i32, i32) {
    %c0_i32 = arith.constant 0 : i32
    %c0_i32_0 = arith.constant 0 : i32
    %c0_i32_1 = arith.constant 0 : i32
    return %c0_i32, %c0_i32_0 : i32, i32
  }
  func.func @transform_1(%arg0: i32, %arg1: i32, %arg2: i32) -> (i32, i32) {
    %c0_i32 = arith.constant 0 : i32
    %c0_i32_0 = arith.constant 0 : i32
    %c0_i32_1 = arith.constant 0 : i32
    return %c0_i32, %c0_i32_0 : i32, i32
  }
  func.func @transform_2(%arg0: i32, %arg1: i32, %arg2: i32) -> (i32, i32) {
    %c0_i32 = arith.constant 0 : i32
    %c0_i32_0 = arith.constant 0 : i32
    %c0_i32_1 = arith.constant 0 : i32
    return %c0_i32, %c0_i32_0 : i32, i32
  }
  func.func @transform_3(%arg0: i32, %arg1: i32, %arg2: i32) -> (i32, i32) {
    %c0_i32 = arith.constant 0 : i32
    %c0_i32_0 = arith.constant 0 : i32
    %c0_i32_1 = arith.constant 0 : i32
    return %c0_i32, %c0_i32_0 : i32, i32
  }
  func.func @transform_4(%arg0: i32, %arg1: i32, %arg2: i32) -> (i32, i32) {
    %c0_i32 = arith.constant 0 : i32
    %c0_i32_0 = arith.constant 0 : i32
    %c0_i32_1 = arith.constant 0 : i32
    return %c0_i32, %c0_i32_0 : i32, i32
  }
  func.func @transform_5(%arg0: i32, %arg1: i32, %arg2: i32) -> (i32, i32) {
    %c0_i32 = arith.constant 0 : i32
    %c0_i32_0 = arith.constant 0 : i32
    %c0_i32_1 = arith.constant 0 : i32
    return %c0_i32, %c0_i32_0 : i32, i32
  }
  func.func @transform_6(%arg0: i32, %arg1: i32, %arg2: i32) -> (i32, i32) {
    %c0_i32 = arith.constant 0 : i32
    %c0_i32_0 = arith.constant 0 : i32
    %c0_i32_1 = arith.constant 0 : i32
    return %c0_i32, %c0_i32_0 : i32, i32
  }
  func.func @transform_7(%arg0: i32, %arg1: i32, %arg2: i32) -> (i32, i32) {
    %c0_i32 = arith.constant 0 : i32
    %c0_i32_0 = arith.constant 0 : i32
    %c0_i32_1 = arith.constant 0 : i32
    return %c0_i32, %c0_i32_0 : i32, i32
  }
  func.func @transform_8(%arg0: i32, %arg1: i32, %arg2: i32) -> (i32, i32, i32) {
    %c1_i32 = arith.constant 1 : i32
    %0 = arith.subi %c1_i32, %arg0 : i32
    %1 = arith.muli %arg1, %0 : i32
    %c1_i32_0 = arith.constant 1 : i32
    %2 = arith.muli %c1_i32_0, %arg0 : i32
    %3 = arith.addi %1, %2 : i32
    %c1_i32_1 = arith.constant 1 : i32
    %4 = arith.subi %c1_i32_1, %arg0 : i32
    %5 = arith.muli %arg2, %4 : i32
    %c0_i32 = arith.constant 0 : i32
    %6 = arith.muli %c0_i32, %arg0 : i32
    %7 = arith.addi %5, %6 : i32
    %c0_i32_2 = arith.constant 0 : i32
    %c0_i32_3 = arith.constant 0 : i32
    return %3, %c0_i32_2, %7 : i32, i32, i32
  }
  func.func @transform_9(%arg0: i32, %arg1: i32, %arg2: i32) -> (i32, i32, i32) {
    %0 = arith.muli %arg1, %arg0 : i32
    %1 = arith.muli %arg2, %arg0 : i32
    %c0_i32 = arith.constant 0 : i32
    %c0_i32_0 = arith.constant 0 : i32
    return %0, %c0_i32, %1 : i32, i32, i32
  }
}

</mosaic_0001>

<llo_original>
// kernel: tpu_custom_call.1
$region0: #{tpu_custom_call.1}
  #allocation0 [shape = 'u32[]', space=smem, size = 0x4, offset = 0x4, fixed_abs, tag = 'smem constant byte address 0x4 - core index']
  #allocation1 [shape = 'u32[144,128]{1,0:T(1,128)}', space=vmem, size = 0x12000, scoped, tag = 'internal scratch']
  #allocation2 [shape = 'f32[4,2]{1,0:T(4,128)}', space=vmem, size = 0x800, scoped, tag = 'scratch operand']
  #allocation3 [shape = 'f32[4,1]{1,0:T(4,128)}', space=vmem, size = 0x800, scoped, tag = 'scratch operand']
  #allocation4 [shape = 'f32[4,1]{1,0:T(4,128)}', space=vmem, size = 0x800, scoped, tag = 'scratch operand']
  #allocation5 [shape = 'f32[4,1]{1,0:T(4,128)}', space=vmem, size = 0x800, scoped, tag = 'scratch operand']
  #allocation6 [shape = 'f32[4,1]{1,0:T(4,128)}', space=vmem, size = 0x800, scoped, tag = 'scratch operand']
  #allocation7 [shape = 'f32[4,1]{1,0:T(4,128)}', space=vmem, size = 0x800, scoped, tag = 'scratch operand']
  #allocation8 [shape = 'f32[2,4,256]{2,1,0:T(4,128)}', space=vmem, size = 0x2000, scoped, tag = 'scratch operand']
  %s0 = inlined_call_operand.vmem [shape: f32[2,32], index: 0, kind: input, shape index: {}]
  %s1 = inlined_call_operand.vmem [shape: f32[32,4], index: 1, kind: input, shape index: {}]
  %s2 = inlined_call_operand.vmem [shape: f32[1,4], index: 2, kind: input, shape index: {}]
  %s3 = inlined_call_operand.vmem [shape: f32[1,4], index: 3, kind: input, shape index: {}]
  %s4 = inlined_call_operand.vmem [shape: f32[4,4], index: 4, kind: input, shape index: {}]
  %s5 = inlined_call_operand.vmem [shape: f32[4,4], index: 5, kind: input, shape index: {}]
  %s6 = inlined_call_operand.vmem [shape: f32[4,1], index: 6, kind: input, shape index: {}]
  %s7 = inlined_call_operand.vmem [shape: f32[4,1], index: 7, kind: input, shape index: {}]
  %s8 = inlined_call_operand.vmem [shape: f32[2,4,256], index: 8, kind: input, shape index: {}]
  %s9 = inlined_call_operand.hbm [shape: f32[2,4,256], index: 9, kind: output, shape index: {}]
  %s10 = sld [smem:[#allocation0]]
  $region89: #{tpu_custom_call.1} parent=0
    _
  %s12 = ssub.s32 1, %s10
  %s13 = scalar_select 0, %s12, %s10
  $region1: #{tpu_custom_call.1} parent=0
    #allocation9 [shape = 'u8[8192]{0}', space=vmem, size = 0x2000, scoped, tag = 'output window, operand 0']
    #allocation10 [shape = 's32[2]{0}', space=sflag, size = 0x8, scoped, tag = 'scoped memory for tpu_custom_call.1']
    %14 = vsyncpa [#allocation10], 0
    %s15 = scalar_lea.sflag [#allocation10], 1
    %16 = vsyncpa %s15, 0
    loop: start=0, step=1, limit=6
    $region2: #{tpu_custom_call.1} parent=1 // loop_pre_header
      _
    $region3: #{tpu_custom_call.1} parent=1 // loop_header
      %s18 = sphi 0, %s22
      %p19 = scmp.ge.s32.totalorder %s18, 6
      %s25 = sphi 0, %s44
      %s26 = sphi 0, %s40
      %s27 = sphi 0, %s36
      %s28 = sphi 0, %s25
      %s29 = sphi 0, %s26
      %s30 = sphi 0, %s27
      %s31 = sphi 0, %s28
      %s32 = sphi 0, %s29
      %s33 = sphi 0, %s30
      %s45 = sphi 0, %s45
      %s47 = sphi 0, %s45
      %s48 = sphi 0, %s47
      %s62 = sphi 0, %s48
      %s66 = sphi 0, %s66
      %s68 = sphi 0, %s66
      %s69 = sphi 0, %s68
      %s83 = sphi 0, %s69
      %s87 = sphi 0, %s87
      %s89 = sphi 0, %s87
      %s90 = sphi 0, %s89
      %s104 = sphi 0, %s90
      %s108 = sphi 0, %s108
      %s110 = sphi 0, %s108
      %s111 = sphi 0, %s110
      %s125 = sphi 0, %s111
      %s129 = sphi 0, %s129
      %s131 = sphi 0, %s129
      %s132 = sphi 0, %s131
      %s146 = sphi 0, %s132
      %s150 = sphi 0, %s150
      %s152 = sphi 0, %s150
      %s153 = sphi 0, %s152
      %s167 = sphi 0, %s153
      %s171 = sphi 0, %s171
      %s173 = sphi 0, %s171
      %s174 = sphi 0, %s173
      %s188 = sphi 0, %s174
      %s192 = sphi 0, %s192
      %s194 = sphi 0, %s192
      %s195 = sphi 0, %s194
      %s209 = sphi 0, %s195
      %s225 = sphi 0, %s227
      %s228 = sphi 0, %s225
      %s229 = sphi 0, %s228
      %s245 = sphi 0, %s229
      %s257 = sphi 0, %s259
      %s260 = sphi 0, %s257
      %s261 = sphi 0, %s260
      %s277 = sphi 0, %s261
    $region4: #{tpu_custom_call.1} parent=1 // loop_header_branch
      %21 = sbr.rel (%p19) target = $region8
    $region5: #{tpu_custom_call.1} parent=1 // loop_body
      %s23 = ssub.s32 %s18, 1
      %s24 = ssub.s32 %s18, 2
      %s34 = sadd.s32 1, %s27
      %p35 = scmp.ge.s32.totalorder %s34, 1
      %s36 = scalar_select %p35, 0, %s34
      %s37 = sadd.s32 1, %s26
      %s38 = scalar_select %p35, %s37, %s26
      %p39 = scmp.ge.s32.totalorder %s38, 2
      %s40 = scalar_select %p39, 0, %s38
      %s41 = sadd.s32 1, %s25
      %s42 = scalar_select %p39, %s41, %s25
      %p43 = scmp.ge.s32.totalorder %s42, 2
      %s44 = scalar_select %p43, 0, %s42
      %s46 = sadd.s32 %s45, 1
      %p49 = scmp.eq.s32.totalorder %s18, 3
      %p50 = scmp.ne.s32.totalorder %s45, %s47
      %p51 = scmp.eq.s32.totalorder %s18, 0
      %p52 = por %p50, %p51
      %p53 = scmp.ne.s32.totalorder %s45, %s47
      %p54 = scmp.eq.s32.totalorder %s23, 3
      %p55 = por %p53, %p54
      %p56 = scmp.ne.s32.totalorder %s47, %s48
      %p57 = scmp.eq.s32.totalorder %s23, 0
      %p58 = por %p56, %p57
      %p59 = scmp.ne.s32.totalorder %s47, %s48
      %p60 = scmp.eq.s32.totalorder %s24, 3
      %p61 = por %p59, %p60
      %p63 = scmp.ne.s32.totalorder %s48, %s62
      %p64 = scmp.eq.s32.totalorder %s24, 0
      %p65 = por %p63, %p64
      %s67 = sadd.s32 %s66, 1
      %p70 = scmp.eq.s32.totalorder %s18, 3
      %p71 = scmp.ne.s32.totalorder %s66, %s68
      %p72 = scmp.eq.s32.totalorder %s18, 0
      %p73 = por %p71, %p72
      %p74 = scmp.ne.s32.totalorder %s66, %s68
      %p75 = scmp.eq.s32.totalorder %s23, 3
      %p76 = por %p74, %p75
      %p77 = scmp.ne.s32.totalorder %s68, %s69
      %p78 = scmp.eq.s32.totalorder %s23, 0
      %p79 = por %p77, %p78
      %p80 = scmp.ne.s32.totalorder %s68, %s69
      %p81 = scmp.eq.s32.totalorder %s24, 3
      %p82 = por %p80, %p81
      %p84 = scmp.ne.s32.totalorder %s69, %s83
      %p85 = scmp.eq.s32.totalorder %s24, 0
      %p86 = por %p84, %p85
      %s88 = sadd.s32 %s87, 1
      %p91 = scmp.eq.s32.totalorder %s18, 3
      %p92 = scmp.ne.s32.totalorder %s87, %s89
      %p93 = scmp.eq.s32.totalorder %s18, 0
      %p94 = por %p92, %p93
      %p95 = scmp.ne.s32.totalorder %s87, %s89
      %p96 = scmp.eq.s32.totalorder %s23, 3
      %p97 = por %p95, %p96
      %p98 = scmp.ne.s32.totalorder %s89, %s90
      %p99 = scmp.eq.s32.totalorder %s23, 0
      %p100 = por %p98, %p99
      %p101 = scmp.ne.s32.totalorder %s89, %s90
      %p102 = scmp.eq.s32.totalorder %s24, 3
      %p103 = por %p101, %p102
      %p105 = scmp.ne.s32.totalorder %s90, %s104
      %p106 = scmp.eq.s32.totalorder %s24, 0
      %p107 = por %p105, %p106
      %s109 = sadd.s32 %s108, 1
      %p112 = scmp.eq.s32.totalorder %s18, 3
      %p113 = scmp.ne.s32.totalorder %s108, %s110
      %p114 = scmp.eq.s32.totalorder %s18, 0
      %p115 = por %p113, %p114
      %p116 = scmp.ne.s32.totalorder %s108, %s110
      %p117 = scmp.eq.s32.totalorder %s23, 3
      %p118 = por %p116, %p117
      %p119 = scmp.ne.s32.totalorder %s110, %s111
      %p120 = scmp.eq.s32.totalorder %s23, 0
      %p121 = por %p119, %p120
      %p122 = scmp.ne.s32.totalorder %s110, %s111
      %p123 = scmp.eq.s32.totalorder %s24, 3
      %p124 = por %p122, %p123
      %p126 = scmp.ne.s32.totalorder %s111, %s125
      %p127 = scmp.eq.s32.totalorder %s24, 0
      %p128 = por %p126, %p127
      %s130 = sadd.s32 %s129, 1
      %p133 = scmp.eq.s32.totalorder %s18, 3
      %p134 = scmp.ne.s32.totalorder %s129, %s131
      %p135 = scmp.eq.s32.totalorder %s18, 0
      %p136 = por %p134, %p135
      %p137 = scmp.ne.s32.totalorder %s129, %s131
      %p138 = scmp.eq.s32.totalorder %s23, 3
      %p139 = por %p137, %p138
      %p140 = scmp.ne.s32.totalorder %s131, %s132
      %p141 = scmp.eq.s32.totalorder %s23, 0
      %p142 = por %p140, %p141
      %p143 = scmp.ne.s32.totalorder %s131, %s132
      %p144 = scmp.eq.s32.totalorder %s24, 3
      %p145 = por %p143, %p144
      %p147 = scmp.ne.s32.totalorder %s132, %s146
      %p148 = scmp.eq.s32.totalorder %s24, 0
      %p149 = por %p147, %p148
      %s151 = sadd.s32 %s150, 1
      %p154 = scmp.eq.s32.totalorder %s18, 3
      %p155 = scmp.ne.s32.totalorder %s150, %s152
      %p156 = scmp.eq.s32.totalorder %s18, 0
      %p157 = por %p155, %p156
      %p158 = scmp.ne.s32.totalorder %s150, %s152
      %p159 = scmp.eq.s32.totalorder %s23, 3
      %p160 = por %p158, %p159
      %p161 = scmp.ne.s32.totalorder %s152, %s153
      %p162 = scmp.eq.s32.totalorder %s23, 0
      %p163 = por %p161, %p162
      %p164 = scmp.ne.s32.totalorder %s152, %s153
      %p165 = scmp.eq.s32.totalorder %s24, 3
      %p166 = por %p164, %p165
      %p168 = scmp.ne.s32.totalorder %s153, %s167
      %p169 = scmp.eq.s32.totalorder %s24, 0
      %p170 = por %p168, %p169
      %s172 = sadd.s32 %s171, 1
      %p175 = scmp.eq.s32.totalorder %s18, 3
      %p176 = scmp.ne.s32.totalorder %s171, %s173
      %p177 = scmp.eq.s32.totalorder %s18, 0
      %p178 = por %p176, %p177
      %p179 = scmp.ne.s32.totalorder %s171, %s173
      %p180 = scmp.eq.s32.totalorder %s23, 3
      %p181 = por %p179, %p180
      %p182 = scmp.ne.s32.totalorder %s173, %s174
      %p183 = scmp.eq.s32.totalorder %s23, 0
      %p184 = por %p182, %p183
      %p185 = scmp.ne.s32.totalorder %s173, %s174
      %p186 = scmp.eq.s32.totalorder %s24, 3
      %p187 = por %p185, %p186
      %p189 = scmp.ne.s32.totalorder %s174, %s188
      %p190 = scmp.eq.s32.totalorder %s24, 0
      %p191 = por %p189, %p190
      %s193 = sadd.s32 %s192, 1
      %p196 = scmp.eq.s32.totalorder %s18, 3
      %p197 = scmp.ne.s32.totalorder %s192, %s194
      %p198 = scmp.eq.s32.totalorder %s18, 0
      %p199 = por %p197, %p198
      %p200 = scmp.ne.s32.totalorder %s192, %s194
      %p201 = scmp.eq.s32.totalorder %s23, 3
      %p202 = por %p200, %p201
      %p203 = scmp.ne.s32.totalorder %s194, %s195
      %p204 = scmp.eq.s32.totalorder %s23, 0
      %p205 = por %p203, %p204
      %p206 = scmp.ne.s32.totalorder %s194, %s195
      %p207 = scmp.eq.s32.totalorder %s24, 3
      %p208 = por %p206, %p207
      %p210 = scmp.ne.s32.totalorder %s195, %s209
      %p211 = scmp.eq.s32.totalorder %s24, 0
      %p212 = por %p210, %p211
      %s213 = ssub.s32 1, %s25
      %s214 = smul.u32 %s26, %s213
      %s215 = sadd.s32 %s214, %s25
      %s216 = smul.u32 %s27, %s213
      %s217 = ssub.s32 1, %s44
      %s218 = smul.u32 %s40, %s217
      %s219 = sadd.s32 %s218, %s44
      %s220 = smul.u32 %s36, %s217
      %s221 = ssub.s32 %s215, %s219
      %s222 = ssub.s32 %s216, %s220
      %s223 = sor.u32 %s221, %s222
      %p224 = scmp.eq.s32.totalorder %s223, 0
      %s226 = sadd.s32 %s225, 1
      %s227 = scalar_select %p224, %s225, %s226
      %p230 = pneg %p224
      %p231 = scmp.eq.s32.totalorder %s18, 3
      %p232 = por %p230, %p231
      %p233 = scmp.ne.s32.totalorder %s225, %s228
      %p234 = scmp.eq.s32.totalorder %s18, 0
      %p235 = por %p233, %p234
      %p236 = scmp.ne.s32.totalorder %s225, %s228
      %p237 = scmp.eq.s32.totalorder %s23, 3
      %p238 = por %p236, %p237
      %p239 = scmp.ne.s32.totalorder %s228, %s229
      %p240 = scmp.eq.s32.totalorder %s23, 0
      %p241 = por %p239, %p240
      %p242 = scmp.ne.s32.totalorder %s228, %s229
      %p243 = scmp.eq.s32.totalorder %s24, 3
      %p244 = por %p242, %p243
      %p246 = scmp.ne.s32.totalorder %s229, %s245
      %p247 = scmp.eq.s32.totalorder %s24, 0
      %p248 = por %p246, %p247
      %s249 = smul.u32 %s26, %s25
      %s250 = smul.u32 %s27, %s25
      %s251 = smul.u32 %s40, %s44
      %s252 = smul.u32 %s36, %s44
      %s253 = ssub.s32 %s249, %s251
      %s254 = ssub.s32 %s250, %s252
      %s255 = sor.u32 %s253, %s254
      %p256 = scmp.eq.s32.totalorder %s255, 0
      %s258 = sadd.s32 %s257, 1
      %s259 = scalar_select %p256, %s257, %s258
      %p262 = pneg %p256
      %p263 = scmp.eq.s32.totalorder %s18, 3
      %p264 = por %p262, %p263
      %p265 = scmp.ne.s32.totalorder %s257, %s260
      %p266 = scmp.eq.s32.totalorder %s18, 0
      %p267 = por %p265, %p266
      %p268 = scmp.ne.s32.totalorder %s257, %s260
      %p269 = scmp.eq.s32.totalorder %s23, 3
      %p270 = por %p268, %p269
      %p271 = scmp.ne.s32.totalorder %s260, %s261
      %p272 = scmp.eq.s32.totalorder %s23, 0
      %p273 = por %p271, %p272
      %p274 = scmp.ne.s32.totalorder %s260, %s261
      %p275 = scmp.eq.s32.totalorder %s24, 3
      %p276 = por %p274, %p275
      %p278 = scmp.ne.s32.totalorder %s261, %s277
      %p279 = scmp.eq.s32.totalorder %s24, 0
      %p280 = por %p278, %p279
      %p281 = scmp.le.s32.totalorder 1, %s18
      %p282 = scmp.lt.s32.totalorder %s18, 5
      %p283 = pnand %p281, %p282
      %p284 = pneg %p283
      // Predicated region
      $region9: #{tpu_custom_call.1} parent=5 // pred_check
        _
      $region10: #{tpu_custom_call.1} parent=5 // pred_check_branch
        %286 = sbr.rel (%p283) target = $region12
      $region11: #{tpu_custom_call.1} parent=5 // pred_region
        %s287 = ssub.s32 %s18, 1
        // Predicated region
        $region13: #{tpu_custom_call.1} parent=11 // pred_check
          %p288 = pneg %p58
        $region14: #{tpu_custom_call.1} parent=11 // pred_check_branch
          %290 = sbr.rel (%p288) target = $region16
        $region15: #{tpu_custom_call.1} parent=11 // pred_region
          _
        $region16: #{tpu_custom_call.1} parent=11 // pred_fallthru
          _
        // Predicated region
        $region17: #{tpu_custom_call.1} parent=11 // pred_check
          %p291 = pneg %p79
        $region18: #{tpu_custom_call.1} parent=11 // pred_check_branch
          %293 = sbr.rel (%p291) target = $region20
        $region19: #{tpu_custom_call.1} parent=11 // pred_region
          _
        $region20: #{tpu_custom_call.1} parent=11 // pred_fallthru
          _
        // Predicated region
        $region21: #{tpu_custom_call.1} parent=11 // pred_check
          %p294 = pneg %p100
        $region22: #{tpu_custom_call.1} parent=11 // pred_check_branch
          %296 = sbr.rel (%p294) target = $region24
        $region23: #{tpu_custom_call.1} parent=11 // pred_region
          _
        $region24: #{tpu_custom_call.1} parent=11 // pred_fallthru
          _
        // Predicated region
        $region25: #{tpu_custom_call.1} parent=11 // pred_check
          %p297 = pneg %p121
        $region26: #{tpu_custom_call.1} parent=11 // pred_check_branch
          %299 = sbr.rel (%p297) target = $region28
        $region27: #{tpu_custom_call.1} parent=11 // pred_region
          _
        $region28: #{tpu_custom_call.1} parent=11 // pred_fallthru
          _
        // Predicated region
        $region29: #{tpu_custom_call.1} parent=11 // pred_check
          %p300 = pneg %p142
        $region30: #{tpu_custom_call.1} parent=11 // pred_check_branch
          %302 = sbr.rel (%p300) target = $region32
        $region31: #{tpu_custom_call.1} parent=11 // pred_region
          _
        $region32: #{tpu_custom_call.1} parent=11 // pred_fallthru
          _
        // Predicated region
        $region33: #{tpu_custom_call.1} parent=11 // pred_check
          %p303 = pneg %p163
        $region34: #{tpu_custom_call.1} parent=11 // pred_check_branch
          %305 = sbr.rel (%p303) target = $region36
        $region35: #{tpu_custom_call.1} parent=11 // pred_region
          _
        $region36: #{tpu_custom_call.1} parent=11 // pred_fallthru
          _
        // Predicated region
        $region37: #{tpu_custom_call.1} parent=11 // pred_check
          %p306 = pneg %p184
        $region38: #{tpu_custom_call.1} parent=11 // pred_check_branch
          %308 = sbr.rel (%p306) target = $region40
        $region39: #{tpu_custom_call.1} parent=11 // pred_region
          _
        $region40: #{tpu_custom_call.1} parent=11 // pred_fallthru
          _
        // Predicated region
        $region41: #{tpu_custom_call.1} parent=11 // pred_check
          %p309 = pneg %p205
        $region42: #{tpu_custom_call.1} parent=11 // pred_check_branch
          %311 = sbr.rel (%p309) target = $region44
        $region43: #{tpu_custom_call.1} parent=11 // pred_region
          _
        $region44: #{tpu_custom_call.1} parent=11 // pred_fallthru
          _
      $region12: #{tpu_custom_call.1} parent=5 // pred_fallthru
        _
      %p312 = scmp.lt.s32.totalorder %s18, 4
      // Predicated region
      $region45: #{tpu_custom_call.1} parent=5 // pred_check
        %p313 = pneg %p312
      $region46: #{tpu_custom_call.1} parent=5 // pred_check_branch
        %315 = sbr.rel (%p313) target = $region48
      $region47: #{tpu_custom_call.1} parent=5 // pred_region
        // Predicated region
        $region49: #{tpu_custom_call.1} parent=47 // pred_check
          %p316 = pneg %p235
        $region50: #{tpu_custom_call.1} parent=47 // pred_check_branch
          %318 = sbr.rel (%p316) target = $region52
        $region51: #{tpu_custom_call.1} parent=47 // pred_region
          %s319 = ssub.s32 1, %s25
          %s320 = smul.u32 %s26, %s319
          %s321 = sadd.s32 %s320, %s25
          %s322 = smul.u32 %s27, %s319
          %s323 = smul.u32 2, %s322
          %p324 = scmp.lt.s32.totalorder %s321, 1
          %s325 = scalar_select %p324, %s321, 1
          %p326 = scmp.lt.s32.totalorder %s323, 1
          %s327 = scalar_select %p326, %s323, 1
          %s328 = smul.addr %s325, 2
          %s329 = sadd.s32 %s327, %s328
          %s330 = smul.addr %s329, 4
          %s331 = scalar_lea.vmem %s8, %s330
          %s332 = ssub.s32 1, %s25
          %s333 = smul.u32 %s26, %s332
          %s334 = sadd.s32 %s333, %s25
          %s335 = smul.u32 %s27, %s332
          %s336 = smul.u32 2, %s335
        $region52: #{tpu_custom_call.1} parent=47 // pred_fallthru
          _
      $region48: #{tpu_custom_call.1} parent=5 // pred_fallthru
        _
      %p337 = scmp.le.s32.totalorder 1, %s18
      %p338 = scmp.lt.s32.totalorder %s18, 5
      %p339 = pnand %p337, %p338
      %p340 = pneg %p339
      // Predicated region
      $region53: #{tpu_custom_call.1} parent=5 // pred_check
        _
      $region54: #{tpu_custom_call.1} parent=5 // pred_check_branch
        %342 = sbr.rel (%p339) target = $region56
      $region55: #{tpu_custom_call.1} parent=5 // pred_region
        %s343 = ssub.s32 %s18, 1
        %p344 = pneg %p58
        %p345 = pneg %p55
        %p346 = pneg %p79
        %p347 = pneg %p76
        %p348 = pneg %p100
        %p349 = pneg %p97
        %p350 = pneg %p121
        %p351 = pneg %p118
        %p352 = pneg %p142
        %p353 = pneg %p139
        %p354 = pneg %p163
        %p355 = pneg %p160
        %p356 = pneg %p184
        %p357 = pneg %p181
        %p358 = pneg %p205
        %p359 = pneg %p202
        %s360 = ssub.s32 1, %s28
        %s361 = smul.u32 %s29, %s360
        %s362 = sadd.s32 %s361, %s28
        %s363 = smul.u32 %s30, %s360
        %s364 = smul.u32 2, %s363
        %p365 = scmp.lt.s32.totalorder %s362, 1
        %s366 = scalar_select %p365, %s362, 1
        %p367 = scmp.lt.s32.totalorder %s364, 1
        %s368 = scalar_select %p367, %s364, 1
        %s369 = smul.addr %s366, 2
        %s370 = sadd.s32 %s368, %s369
        %s371 = smul.addr %s370, 4
        %s372 = scalar_lea.vmem %s8, %s371
        %p373 = pneg %p241
        %p374 = pneg %p238
        %p375 = pneg %p273
        %p376 = pneg %p270
        %s377 = sand.u32 %s260, 1
        %s378 = scalar_lea.sflag [#allocation10], %s377
        %s379 = sand.u32 %s260, 1
        %s380 = smul.addr %s379, 8
        %s381 = scalar_lea.vmem [#allocation9], %s380
        %s382 = ssub.s32 1, %s28
        %s383 = smul.u32 %s29, %s382
        %s384 = sadd.s32 %s383, %s28
        %s385 = smul.u32 %s30, %s382
        %s386 = smul.u32 2, %s385
        %p387 = scmp.lt.s32.totalorder %s384, 1
        %s388 = scalar_select %p387, %s384, 1
        %p389 = scmp.lt.s32.totalorder %s386, 1
        %s390 = scalar_select %p389, %s386, 1
        %s391 = smul.addr %s388, 2
        %s392 = sadd.s32 %s390, %s391
        %s393 = smul.addr %s392, 4
        %s394 = scalar_lea.vmem %s8, %s393
        %s395 = ssub.s32 1, %s28
        %s396 = smul.u32 %s29, %s395
        %s397 = sadd.s32 %s396, %s28
        %s398 = smul.u32 %s30, %s395
        %s399 = smul.u32 2, %s398
        %s400 = smul.u32 %s29, %s28
        %s401 = smul.u32 %s30, %s28
        %s402 = smul.u32 2, %s401
        %p403 = scmp.eq.s32.totalorder %s28, 0
        %p404 = scmp.eq.s32.totalorder %s29, 0
        %p405 = scmp.eq.s32.totalorder %s30, 0
        %p406 = pnand %p404, %p405
        %p407 = pneg %p406
        %p408 = pnand %p403, %p407
        %p409 = pneg %p408
        // Predicated region
        $region57: #{tpu_custom_call.1} parent=55 // pred_check
          _
        $region58: #{tpu_custom_call.1} parent=55 // pred_check_branch
          %411 = sbr.rel (%p408) target = $region60
        $region59: #{tpu_custom_call.1} parent=55 // pred_region
          %v412 = vld [vmem:[%s0] sm:$0x3]
          %v413 = vld [vmem:[%s1] sm:$0xff]
          %v414 = vld [vmem:[%s1 + $0x8] sm:$0xff]
          %v415 = vld [vmem:[%s1 + $0x10] sm:$0xff]
          %v416 = vld [vmem:[%s1 + $0x18] sm:$0xff]
          %vm417 = vcmask 261120
          %v419 = vsel %vm417, %v412, 0
          %421 = vmatprep.subr.mxu0 0.0
          %422 = vmatpush1.msra.mxu0 %v413
          %423 = vmatprep.subr.mxu0 0.0
          %424 = vmatpush1.msra.mxu0 %v414
          %425 = vmatprep.subr.mxu0 0.0
          %426 = vmatpush1.msra.mxu0 %v415
          %427 = vmatprep.subr.mxu0 0.0
          %428 = vmatpush1.msra.mxu0 %v416
          %429 = vmatprep.subr.mxu0 0.0
          %430 = vmatpush1.msra.mxu0 0.0
          %431 = vmatprep.subr.mxu0 0.0
          %432 = vmatpush1.msra.mxu0 0.0
          %433 = vmatprep.subr.mxu0 0.0
          %434 = vmatpush1.msra.mxu0 0.0
          %435 = vmatprep.subr.mxu0 0.0
          %436 = vmatpush1.msra.mxu0 0.0
          %437 = vmatprep.subr.mxu0 0.0
          %438 = vmatpush1.msra.mxu0 0.0
          %439 = vmatprep.subr.mxu0 0.0
          %440 = vmatpush1.msra.mxu0 0.0
          %441 = vmatprep.subr.mxu0 0.0
          %442 = vmatpush1.msra.mxu0 0.0
          %443 = vmatprep.subr.mxu0 0.0
          %444 = vmatpush1.msra.mxu0 0.0
          %445 = vmatprep.subr.mxu0 0.0
          %446 = vmatpush1.msra.mxu0 0.0
          %447 = vmatprep.subr.mxu0 0.0
          %448 = vmatpush1.msra.mxu0 0.0
          %449 = vmatprep.subr.mxu0 0.0
          %450 = vmatpush1.msra.mxu0 0.0
          %451 = vmatprep.subr.mxu0 0.0
          %452 = vmatpush1.msra.mxu0 0.0
          %453 = vmatprep.subr.mxu0 0.0
          %454 = vmatpush1.msra.mxu0 0.0
          %455 = vmatprep.subr.mxu0 0.0
          %456 = vmatpush1.msra.mxu0 0.0
          %457 = vmatprep.subr.mxu0 0.0
          %458 = vmatpush1.msra.mxu0 0.0
          %459 = vmatprep.subr.mxu0 0.0
          %460 = vmatpush1.msra.mxu0 0.0
          %461 = vmatprep.subr.mxu0 0.0
          %462 = vmatpush1.msra.mxu0 0.0
          %463 = vmatprep.subr.mxu0 0.0
          %464 = vmatpush1.msra.mxu0 0.0
          %465 = vmatprep.subr.mxu0 0.0
          %466 = vmatpush1.msra.mxu0 0.0
          %467 = vmatprep.subr.mxu0 0.0
          %468 = vmatpush1.msra.mxu0 0.0
          %469 = vmatprep.subr.mxu0 0.0
          %470 = vmatpush1.msra.mxu0 0.0
          %471 = vmatprep.subr.mxu0 0.0
          %472 = vmatpush1.msra.mxu0 0.0
          %473 = vmatprep.subr.mxu0 0.0
          %474 = vmatpush1.msra.mxu0 0.0
          %475 = vmatprep.subr.mxu0 0.0
          %476 = vmatpush1.msra.mxu0 0.0
          %477 = vmatprep.subr.mxu0 0.0
          %478 = vmatpush1.msra.mxu0 0.0
          %479 = vmatprep.subr.mxu0 0.0
          %480 = vmatpush1.msra.mxu0 0.0
          %481 = vmatprep.subr.mxu0 0.0
          %482 = vmatpush1.msra.mxu0 0.0
          %483 = vmatprep.subr.mxu0 0.0
          %484 = vmatpush1.msra.mxu0 0.0
          %485 = vmatprep.mubr.f32.mxu0 0.0
          %486 = vmatmul.mubr.f32.gmra.mrb[0].mxu0 %v419
          %v487 = vpop.f32.mrb[0].mxu0
          %v488 = vadd.f32 0.0, %v487
          %v489 = vpop.f32.mrb[0].mxu0
          %490 = vdwg.mxu0
          %v491 = vmax.f32 %v488, 0.0
          %vm492 = vcmask 25600
          %v493 = vsel %vm492, %v491, 0.0
          %v494 = vrot.slane %v493, 4
          %v495 = vadd.f32 %v493, %v494
          %v496 = vrot.slane %v495, 2
          %v497 = vadd.f32 %v495, %v496
          %v498 = vrot.slane %v497, 1
          %v499 = vadd.f32 %v497, %v498
          %v500 = vmul.f32 %v499, 0.5
          %v501 = vmul.f32 %v491, %v491
          %v502 = vsel %vm492, %v501, 0.0
          %v503 = vrot.slane %v502, 4
          %v504 = vadd.f32 %v502, %v503
          %v505 = vrot.slane %v504, 2
          %v506 = vadd.f32 %v504, %v505
          %v507 = vrot.slane %v506, 1
          %v508 = vadd.f32 %v506, %v507
          %v509 = vmul.f32 %v508, 0.5
          %v510 = vmul.f32 %v500, %v500
          %v511 = vsub.f32 %v509, %v510
          %v512 = vmax.f32 %v511, 0.0
          %v513 = vld [vmem:[%s2] sm:$0x1]
          %v514 = vadd.f32 %v512, 1e-05
          %v515 = vrsqrt.pop %v514
          %v516 = vmul.f32 %v513, %v515
          %v517 = vld [vmem:[%s3] sm:$0x1]
          %v518 = vmul.f32 %v500, %v516
          %v519 = vsub.f32 %v517, %v518
          %v521 = vlaneseq
          %v522 = vshrl.u32 %v521, 7
          %v523 = vsub.s32 0, %v522
          %v524 = vrot.slane %v516, %v523
          %v526 = vmul.f32 %v491, %v524
          %v528 = vlaneseq
          %v529 = vshrl.u32 %v528, 7
          %v530 = vsub.s32 0, %v529
          %v531 = vrot.slane %v519, %v530
          %v533 = vadd.f32 %v526, %v531
          %v534 = vld [vmem:[%s5] sm:$0xf]
          %vm535 = vcmask 31744
          %v537 = vsel %vm535, %v534, 0
          %v540 = vsel %vm535, %v533, 0
          %542 = vmatprep.subr.mxu0 0.0
          %543 = vmatpush1.xpose.msra.mxu0 %v540
          %544 = vmatprep.subr.mxu0 0.0
          %545 = vmatpush1.xpose.msra.mxu0 0.0
          %546 = vmatprep.subr.mxu0 0.0
          %547 = vmatpush1.xpose.msra.mxu0 0.0
          %548 = vmatprep.subr.mxu0 0.0
          %549 = vmatpush1.xpose.msra.mxu0 0.0
          %550 = vmatprep.subr.mxu0 0.0
          %551 = vmatpush1.xpose.msra.mxu0 0.0
          %552 = vmatprep.subr.mxu0 0.0
          %553 = vmatpush1.xpose.msra.mxu0 0.0
          %554 = vmatprep.subr.mxu0 0.0
          %555 = vmatpush1.xpose.msra.mxu0 0.0
          %556 = vmatprep.subr.mxu0 0.0
          %557 = vmatpush1.xpose.msra.mxu0 0.0
          %558 = vmatprep.subr.mxu0 0.0
          %559 = vmatpush1.xpose.msra.mxu0 0.0
          %560 = vmatprep.subr.mxu0 0.0
          %561 = vmatpush1.xpose.msra.mxu0 0.0
          %562 = vmatprep.subr.mxu0 0.0
          %563 = vmatpush1.xpose.msra.mxu0 0.0
          %564 = vmatprep.subr.mxu0 0.0
          %565 = vmatpush1.xpose.msra.mxu0 0.0
          %566 = vmatprep.subr.mxu0 0.0
          %567 = vmatpush1.xpose.msra.mxu0 0.0
          %568 = vmatprep.subr.mxu0 0.0
          %569 = vmatpush1.xpose.msra.mxu0 0.0
          %570 = vmatprep.subr.mxu0 0.0
          %571 = vmatpush1.xpose.msra.mxu0 0.0
          %572 = vmatprep.subr.mxu0 0.0
          %573 = vmatpush1.xpose.msra.mxu0 0.0
          %574 = vmatprep.subr.mxu0 0.0
          %575 = vmatpush1.xpose.msra.mxu0 0.0
          %576 = vmatprep.subr.mxu0 0.0
          %577 = vmatpush1.xpose.msra.mxu0 0.0
          %578 = vmatprep.subr.mxu0 0.0
          %579 = vmatpush1.xpose.msra.mxu0 0.0
          %580 = vmatprep.subr.mxu0 0.0
          %581 = vmatpush1.xpose.msra.mxu0 0.0
          %582 = vmatprep.subr.mxu0 0.0
          %583 = vmatpush1.xpose.msra.mxu0 0.0
          %584 = vmatprep.subr.mxu0 0.0
          %585 = vmatpush1.xpose.msra.mxu0 0.0
          %586 = vmatprep.subr.mxu0 0.0
          %587 = vmatpush1.xpose.msra.mxu0 0.0
          %588 = vmatprep.subr.mxu0 0.0
          %589 = vmatpush1.xpose.msra.mxu0 0.0
          %590 = vmatprep.subr.mxu0 0.0
          %591 = vmatpush1.xpose.msra.mxu0 0.0
          %592 = vmatprep.subr.mxu0 0.0
          %593 = vmatpush1.xpose.msra.mxu0 0.0
          %594 = vmatprep.subr.mxu0 0.0
          %595 = vmatpush1.xpose.msra.mxu0 0.0
          %596 = vmatprep.subr.mxu0 0.0
          %597 = vmatpush1.xpose.msra.mxu0 0.0
          %598 = vmatprep.subr.mxu0 0.0
          %599 = vmatpush1.xpose.msra.mxu0 0.0
          %600 = vmatprep.subr.mxu0 0.0
          %601 = vmatpush1.xpose.msra.mxu0 0.0
          %602 = vmatprep.subr.mxu0 0.0
          %603 = vmatpush1.xpose.msra.mxu0 0.0
          %604 = vmatprep.subr.mxu0 0.0
          %605 = vmatpush1.xpose.msra.mxu0 0.0
          %606 = vmatprep.mubr.f32.mxu0 0.0
          %607 = vmatmul.mubr.f32.gmra.mrb[0].mxu0 %v537
          %v608 = vpop.f32.mrb[0].mxu0
          %v609 = vadd.f32 0.0, %v608
          %v610 = vpop.f32.mrb[0].mxu0
          %611 = vdwg.mxu0
          %vm612 = vcmask 11264
          %613 = vst.msk [vmem:[#allocation2] sm:$0xf] %vm612, %v609
          %vm614 = vcmask 3072
          %615 = vst.msk [vmem:[#allocation4] sm:$0xf] %vm614, 0.0
          %616 = vst.msk [vmem:[#allocation5] sm:$0xf] %vm614, 0.0
        $region60: #{tpu_custom_call.1} parent=55 // pred_fallthru
          _
        // Predicated region
        $region61: #{tpu_custom_call.1} parent=55 // pred_check
          %p617 = pneg %p405
        $region62: #{tpu_custom_call.1} parent=55 // pred_check_branch
          %619 = sbr.rel (%p617) target = $region64
        $region63: #{tpu_custom_call.1} parent=55 // pred_region
          %v620 = vlaneseq
          %v621 = vand.u32 %v620, 127
          %v622 = vstv %s29
          %vm623 = vcmp.eq.s32.totalorder %v621, %v622
          %v624 = vld [vmem:[#allocation2] sm:$0xf]
          %v625 = vsel %vm623, %v624, 0.0
          %vm626 = vcmask 11264
          %v627 = vsel %vm626, %v625, 0.0
          %628 = vadd.xlane.f32.xlu0 %v627
          %v629 = vpop.xlane.xlu0 %628
          %vm630 = vcmask 3072
          %631 = vst.msk [vmem:[#allocation3] sm:$0xf] %vm630, %v629
        $region64: #{tpu_custom_call.1} parent=55 // pred_fallthru
          _
        // Predicated region
        $region65: #{tpu_custom_call.1} parent=55 // pred_check
          %p632 = pneg %p403
        $region66: #{tpu_custom_call.1} parent=55 // pred_check_branch
          %634 = sbr.rel (%p632) target = $region68
        $region67: #{tpu_custom_call.1} parent=55 // pred_region
          %v635 = vld [vmem:[%s4] sm:$0xf]
          %v636 = vld [vmem:[%s394] sm:$0xff]
          %v637 = vld [vmem:[#allocation3] sm:$0xf]
          %639 = vset.pattern.permute.xlu0 0
          %640 = vperm.xlu0 %639, %v637
          %v641 = vpop.permute.xlu0 %640
          %v644 = vcombine.high %v636, %v636
          %vm645 = vcmask 31744
          %v647 = vsel %vm645, %v635, 0
          %vm649 = vcmask 1043456
          %v650 = vsel %vm649, %v636, 0
          %v652 = vsel %vm649, %v644, 0
          %654 = vmatprep.subr.mxu0 %v652
          %655 = vmatpush1.msra.mxu0 %v650
          %656 = vmatprep.subr.mxu0 0.0
          %657 = vmatpush1.msra.mxu0 0.0
          %658 = vmatprep.subr.mxu0 0.0
          %659 = vmatpush1.msra.mxu0 0.0
          %660 = vmatprep.subr.mxu0 0.0
          %661 = vmatpush1.msra.mxu0 0.0
          %662 = vmatprep.subr.mxu0 0.0
          %663 = vmatpush1.msra.mxu0 0.0
          %664 = vmatprep.subr.mxu0 0.0
          %665 = vmatpush1.msra.mxu0 0.0
          %666 = vmatprep.subr.mxu0 0.0
          %667 = vmatpush1.msra.mxu0 0.0
          %668 = vmatprep.subr.mxu0 0.0
          %669 = vmatpush1.msra.mxu0 0.0
          %670 = vmatprep.subr.mxu0 0.0
          %671 = vmatpush1.msra.mxu0 0.0
          %672 = vmatprep.subr.mxu0 0.0
          %673 = vmatpush1.msra.mxu0 0.0
          %674 = vmatprep.subr.mxu0 0.0
          %675 = vmatpush1.msra.mxu0 0.0
          %676 = vmatprep.subr.mxu0 0.0
          %677 = vmatpush1.msra.mxu0 0.0
          %678 = vmatprep.subr.mxu0 0.0
          %679 = vmatpush1.msra.mxu0 0.0
          %680 = vmatprep.subr.mxu0 0.0
          %681 = vmatpush1.msra.mxu0 0.0
          %682 = vmatprep.subr.mxu0 0.0
          %683 = vmatpush1.msra.mxu0 0.0
          %684 = vmatprep.subr.mxu0 0.0
          %685 = vmatpush1.msra.mxu0 0.0
          %686 = vmatprep.subr.mxu0 0.0
          %687 = vmatpush1.msra.mxu0 0.0
          %688 = vmatprep.subr.mxu0 0.0
          %689 = vmatpush1.msra.mxu0 0.0
          %690 = vmatprep.subr.mxu0 0.0
          %691 = vmatpush1.msra.mxu0 0.0
          %692 = vmatprep.subr.mxu0 0.0
          %693 = vmatpush1.msra.mxu0 0.0
          %694 = vmatprep.subr.mxu0 0.0
          %695 = vmatpush1.msra.mxu0 0.0
          %696 = vmatprep.subr.mxu0 0.0
          %697 = vmatpush1.msra.mxu0 0.0
          %698 = vmatprep.subr.mxu0 0.0
          %699 = vmatpush1.msra.mxu0 0.0
          %700 = vmatprep.subr.mxu0 0.0
          %701 = vmatpush1.msra.mxu0 0.0
          %702 = vmatprep.subr.mxu0 0.0
          %703 = vmatpush1.msra.mxu0 0.0
          %704 = vmatprep.subr.mxu0 0.0
          %705 = vmatpush1.msra.mxu0 0.0
          %706 = vmatprep.subr.mxu0 0.0
          %707 = vmatpush1.msra.mxu0 0.0
          %708 = vmatprep.subr.mxu0 0.0
          %709 = vmatpush1.msra.mxu0 0.0
          %710 = vmatprep.subr.mxu0 0.0
          %711 = vmatpush1.msra.mxu0 0.0
          %712 = vmatprep.subr.mxu0 0.0
          %713 = vmatpush1.msra.mxu0 0.0
          %714 = vmatprep.subr.mxu0 0.0
          %715 = vmatpush1.msra.mxu0 0.0
          %716 = vmatprep.subr.mxu0 0.0
          %717 = vmatpush1.msra.mxu0 0.0
          %718 = vmatprep.mubr.f32.mxu0 0.0
          %719 = vmatmul.mubr.f32.gmra.mrb[0].mxu0 %v647
          %v720 = vpop.f32.mrb[0].mxu0
          %v721 = vadd.f32 %v641, %v720
          %v722 = vpop.f32.mrb[0].mxu0
          %v723 = vadd.f32 %v641, %v722
          %724 = vdwg.mxu0
          %v725 = vmax.f32 %v721, 0.0
          %v726 = vmax.f32 %v723, 0.0
          %v727 = vld [vmem:[#allocation4] sm:$0xf]
          %v728 = vsel %vm649, %v725, 0.0
          %v729 = vsel %vm649, %v726, 0.0
          %v730 = vadd.f32 %v728, %v729
          %731 = vadd.xlane.f32.xlu0 %v730
          %v732 = vpop.xlane.xlu0 %731
          %v733 = vadd.f32 %v727, %v732
          %vm734 = vcmask 3072
          %735 = vst.msk [vmem:[#allocation4] sm:$0xf] %vm734, %v733
          %v736 = vld [vmem:[#allocation5] sm:$0xf]
          %v737 = vmul.f32 %v725, %v725
          %v738 = vmul.f32 %v726, %v726
          %v739 = vsel %vm649, %v737, 0.0
          %v740 = vsel %vm649, %v738, 0.0
          %v741 = vadd.f32 %v739, %v740
          %742 = vadd.xlane.f32.xlu0 %v741
          %v743 = vpop.xlane.xlu0 %742
          %v744 = vadd.f32 %v736, %v743
          %745 = vst.msk [vmem:[#allocation5] sm:$0xf] %vm734, %v744
          %s746 = sadd.s32 %s29, %s30
          %v749 = vcombine.low %v725, %v726
          %s751 = smul.u32 %s746, 2
          %s752 = smul.addr %s751, 4
          %s753 = scalar_lea.vmem [#allocation8], %s752
          %754 = vst [vmem:[%s753] sm:$0xff] %v749
        $region68: #{tpu_custom_call.1} parent=55 // pred_fallthru
          _
        %p755 = scmp.eq.s32.totalorder %s28, 1
        %p756 = pnand %p755, %p407
        %p757 = pneg %p756
        // Predicated region
        $region69: #{tpu_custom_call.1} parent=55 // pred_check
          _
        $region70: #{tpu_custom_call.1} parent=55 // pred_check_branch
          %759 = sbr.rel (%p756) target = $region72
        $region71: #{tpu_custom_call.1} parent=55 // pred_region
          %v760 = vld [vmem:[#allocation4] sm:$0xf]
          %v761 = vmul.f32 %v760, 0.001953125
          %v762 = vld [vmem:[#allocation5] sm:$0xf]
          %v763 = vmul.f32 %v762, 0.001953125
          %v764 = vmul.f32 %v761, %v761
          %v765 = vsub.f32 %v763, %v764
          %v766 = vmax.f32 %v765, 0.0
          %v767 = vld [vmem:[%s6] sm:$0xf]
          %v768 = vadd.f32 %v766, 1e-05
          %v769 = vrsqrt.pop %v768
          %v770 = vmul.f32 %v767, %v769
          %vm771 = vcmask 3072
          %772 = vst.msk [vmem:[#allocation6] sm:$0xf] %vm771, %v770
          %v773 = vld [vmem:[%s7] sm:$0xf]
          %v774 = vmul.f32 %v761, %v770
          %v775 = vsub.f32 %v773, %v774
          %776 = vst.msk [vmem:[#allocation7] sm:$0xf] %vm771, %v775
        $region72: #{tpu_custom_call.1} parent=55 // pred_fallthru
          _
        // Predicated region
        $region73: #{tpu_custom_call.1} parent=55 // pred_check
          %p777 = pneg %p755
        $region74: #{tpu_custom_call.1} parent=55 // pred_check_branch
          %779 = sbr.rel (%p777) target = $region76
        $region75: #{tpu_custom_call.1} parent=55 // pred_region
          %s780 = sadd.s32 %s29, %s30
          %s781 = smul.u32 %s780, 2
          %s782 = smul.addr %s781, 4
          %s783 = scalar_lea.vmem [#allocation8], %s782
          %v784 = vld [vmem:[%s783] sm:$0xff]
          %v785 = vld [vmem:[#allocation6] sm:$0xf]
          %787 = vset.pattern.permute.xlu0 0
          %788 = vperm.xlu0 %787, %v785
          %v789 = vpop.permute.xlu0 %788
          %v791 = vunpack.c.l.s4 839922192
          %v792 = vunpack.c.0.s8 %v791
          %v793 = vlaneseq
          %v794 = vshrl.u32 %v793, 7
          %v795 = vsub.s32 %v792, %v794
          %v796 = vrot.slane %v789, %v795
          %v798 = vmul.f32 %v784, %v796
          %v799 = vld [vmem:[#allocation7] sm:$0xf]
          %801 = vset.pattern.permute.xlu0 0
          %802 = vperm.xlu0 %801, %v799
          %v803 = vpop.permute.xlu0 %802
          %v805 = vunpack.c.l.s4 839922192
          %v806 = vunpack.c.0.s8 %v805
          %v807 = vlaneseq
          %v808 = vshrl.u32 %v807, 7
          %v809 = vsub.s32 %v806, %v808
          %v810 = vrot.slane %v803, %v809
          %v812 = vadd.f32 %v798, %v810
          %813 = vst [vmem:[%s381] sm:$0xff] %v812
        $region76: #{tpu_custom_call.1} parent=55 // pred_fallthru
          _
        %s814 = sand.u32 %s260, 1
        %s815 = scalar_lea.sflag [#allocation10], %s814
        %s816 = sand.u32 %s260, 1
        %s817 = smul.addr %s816, 8
        %s818 = scalar_lea.vmem [#allocation9], %s817
        // Predicated region
        $region77: #{tpu_custom_call.1} parent=55 // pred_check
          %p819 = pneg %p270
        $region78: #{tpu_custom_call.1} parent=55 // pred_check_branch
          %821 = sbr.rel (%p819) target = $region80
        $region79: #{tpu_custom_call.1} parent=55 // pred_region
          %s822 = smul.u32 %s29, %s28
          %s823 = smul.u32 %s30, %s28
          %s824 = smul.u32 2, %s823
          %s826 = ssub.s32 128, 128
          %827 = vsyncadd %s815, %s826
          %s828 = smul.addr %s822, 2
          %s829 = sadd.s32 %s824, %s828
          %s830 = smul.addr %s829, 64
          %s831 = scalar_lea.hbm %s9, %s830
          %s833 = sshll.u32 %s818, 4
          %s834 = int_to_ptr.vmem [resolvable:$true] %s833
          %836 = dma.vmem_to_hbm [thread:$0]  %s834, 128, %s831, %s815
        $region80: #{tpu_custom_call.1} parent=55 // pred_fallthru
          _
      $region56: #{tpu_custom_call.1} parent=5 // pred_fallthru
        _
      %p837 = scmp.le.s32.totalorder 2, %s18
      // Predicated region
      $region81: #{tpu_custom_call.1} parent=5 // pred_check
        %p838 = pneg %p837
      $region82: #{tpu_custom_call.1} parent=5 // pred_check_branch
        %840 = sbr.rel (%p838) target = $region84
      $region83: #{tpu_custom_call.1} parent=5 // pred_region
        %s841 = ssub.s32 %s18, 2
        // Predicated region
        $region85: #{tpu_custom_call.1} parent=83 // pred_check
          %p842 = pneg %p276
        $region86: #{tpu_custom_call.1} parent=83 // pred_check_branch
          %844 = sbr.rel (%p842) target = $region88
        $region87: #{tpu_custom_call.1} parent=83 // pred_region
          %s845 = sand.u32 %s261, 1
          %s846 = scalar_lea.sflag [#allocation10], %s845
          %s847 = sand.u32 %s261, 1
          %s848 = smul.addr %s847, 8
          %s849 = scalar_lea.vmem [#allocation9], %s848
          %850 = dma.done %s846, 128
        $region88: #{tpu_custom_call.1} parent=83 // pred_fallthru
          _
      $region84: #{tpu_custom_call.1} parent=5 // pred_fallthru
        _
    $region6: #{tpu_custom_call.1} parent=1 // loop_footer
      %s22 = sadd.s32 1, %s18
    $region7: #{tpu_custom_call.1} parent=1 // loop_footer_branch
      %17 = sbr.rel target = $region3
    $region8: #{tpu_custom_call.1} parent=1 // loop_exit
      _
    %851 = vsyncpa [#allocation10], 1
    %s852 = scalar_lea.sflag [#allocation10], 1
    %853 = vsyncpa %s852, 1

</llo_original>
